<compile_context>
chip_gen: v6e
topology: v6e:2x2x1
jax: 0.10.0
libtpu: 0.0.40
codegen_flags: <defaults>
</compile_context>

<pallas_src>
import functools

import jax
import jax.numpy as jnp
from jax.experimental import pallas as pl
from jax.experimental.pallas import tpu as pltpu

EPS = 1e-5                       # nn.InstanceNorm2d default eps
VMEM_LIMIT = 32 * 1024 * 1024    # safe on v5e / v6e / v7x scoped budgets
ACT_DTYPE = jnp.bfloat16         # inter-layer activation dtype


def _round_up(x, m):
    return ((x + m - 1) // m) * m


# ---------------------------------------------------------------------------
# Kernel 1: tiled conv matmul
#   - fused bias + act for un-normalised layers
#   - per-tile channel sum / sumsq partials for InstanceNorm layers
# ---------------------------------------------------------------------------
def _conv_mm_kernel(*refs, use_norm, act):
    if use_norm:
        x_ref, w_ref, y_ref, stats_ref, acc_ref = refs
        b_ref = None
    else:
        x_ref, w_ref, b_ref, y_ref, acc_ref = refs
        stats_ref = None

    k = pl.program_id(2)

    @pl.when(k == 0)
    def _():
        acc_ref[...] = jnp.zeros_like(acc_ref)

    acc_ref[...] += jnp.dot(x_ref[0], w_ref[...],
                            preferred_element_type=jnp.float32)

    @pl.when(k == pl.num_programs(2) - 1)
    def _():
        acc = acc_ref[...]                                    # (PT, Cpad) f32
        if use_norm:
            # bias skipped (cancelled exactly by the mean subtraction);
            # emit per-tile sum / sum-of-squares for the second pass.
            ssum = jnp.sum(acc, axis=0, keepdims=True)        # (1, Cpad)
            ssq = jnp.sum(acc * acc, axis=0, keepdims=True)   # (1, Cpad)
            rows = jax.lax.broadcasted_iota(jnp.int32, (8, acc.shape[1]), 0)
            stats_ref[0, 0] = (jnp.where(rows == 0, ssum, 0.0) +
                               jnp.where(rows == 1, ssq, 0.0))
            y_ref[0] = acc.astype(y_ref.dtype)
        else:
            acc = acc + b_ref[...]
            if act == "relu":
                acc = jnp.maximum(acc, 0.0)
            elif act == "tanh":
                acc = jnp.tanh(acc)
            y_ref[0] = acc.astype(y_ref.dtype)


def conv_matmul(patches, w_mat, bias, *, use_norm, act, out_dtype):
    """patches (N,P,K) @ w_mat (K,Cout)  ->  (N,P,Cpad) [, per-tile stats].

    K and Cout are zero-padded to lane-friendly multiples of 128, P is tiled
    (TILE_P <= 512) so blocks double-buffer and VMEM stays bounded; K streams
    through an f32 accumulator scratch; MXU operands are bf16.
    """
    N, P, K = patches.shape
    Cout = w_mat.shape[1]

    Cpad = _round_up(Cout, 128)
    if _round_up(K, 128) <= 1024:
        Kpad = _round_up(K, 128)
        KT = Kpad
    else:
        Kpad = _round_up(K, 256)
        KT = 256
    PT = 512 if P >= 512 else _round_up(P, 8)
    Ppad = _round_up(P, PT)

    if Ppad != P or Kpad != K:
        patches = jnp.pad(patches, ((0, 0), (0, Ppad - P), (0, Kpad - K)))
    if Kpad != K or Cpad != Cout:
        w_mat = jnp.pad(w_mat, ((0, Kpad - K), (0, Cpad - Cout)))

    patches = patches.astype(jnp.bfloat16)       # feed the MXU bf16
    w_mat = w_mat.astype(jnp.bfloat16)

    n_p = Ppad // PT
    n_k = Kpad // KT

    x_spec = pl.BlockSpec((1, PT, KT), lambda n, p, k: (n, p, k))
    w_spec = pl.BlockSpec((KT, Cpad), lambda n, p, k: (k, 0))
    y_spec = pl.BlockSpec((1, PT, Cpad), lambda n, p, k: (n, p, 0))

    kernel = functools.partial(_conv_mm_kernel, use_norm=use_norm, act=act)

    if use_norm:
        in_specs = [x_spec, w_spec]
        args = (patches, w_mat)
        out_shape = (jax.ShapeDtypeStruct((N, Ppad, Cpad), out_dtype),
                     jax.ShapeDtypeStruct((N, n_p, 8, Cpad), jnp.float32))
        out_specs = [y_spec,
                     pl.BlockSpec((1, 1, 8, Cpad), lambda n, p, k: (n, p, 0, 0))]
    else:
        bias2 = jnp.pad(bias.astype(jnp.float32),
                        (0, Cpad - Cout)).reshape(1, Cpad)
        in_specs = [x_spec, w_spec,
                    pl.BlockSpec((1, Cpad), lambda n, p, k: (0, 0))]
        args = (patches, w_mat, bias2)
        out_shape = jax.ShapeDtypeStruct((N, Ppad, Cpad), out_dtype)
        out_specs = y_spec

    out = pl.pallas_call(
        kernel,
        out_shape=out_shape,
        grid_spec=pltpu.PrefetchScalarGridSpec(
            num_scalar_prefetch=0,
            grid=(N, n_p, n_k),
            in_specs=in_specs,
            out_specs=out_specs,
            scratch_shapes=[pltpu.VMEM((PT, Cpad), jnp.float32)],
        ),
        compiler_params=pltpu.CompilerParams(
            dimension_semantics=("parallel", "parallel", "arbitrary"),
            vmem_limit_bytes=VMEM_LIMIT,
        ),
    )(*args)

    if use_norm:
        y, stats = out
        if Ppad != P:
            y = y[:, :P, :]
        return y, stats
    y = out
    if Ppad != P:
        y = y[:, :P, :]
    return y


# ---------------------------------------------------------------------------
# Kernel 2: InstanceNorm affine + activation + optional residual add
# ---------------------------------------------------------------------------
def _norm_act_kernel(*refs, act, has_res):
    if has_res:
        y_ref, aff_ref, r_ref, o_ref = refs
    else:
        y_ref, aff_ref, o_ref = refs
        r_ref = None

    y = y_ref[0].astype(jnp.float32)          # (PT, Cpad)
    aff = aff_ref[0]                          # (8, Cpad) f32: row0=scale, row1=shift
    out = y * aff[0:1, :] + aff[1:2, :]
    if act == "relu":
        out = jnp.maximum(out, 0.0)
    elif act == "tanh":
        out = jnp.tanh(out)
    if r_ref is not None:
        out = out + r_ref[0].astype(jnp.float32)
    o_ref[0] = out.astype(o_ref.dtype)


def instance_norm_act(y, aff, residual=None, *, act, out_dtype):
    N, P, Cpad = y.shape
    PT = 512 if P >= 512 else _round_up(P, 8)
    Ppad = _round_up(P, PT)
    if Ppad != P:
        y = jnp.pad(y, ((0, 0), (0, Ppad - P), (0, 0)))
        if residual is not None:
            residual = jnp.pad(residual, ((0, 0), (0, Ppad - P), (0, 0)))
    n_p = Ppad // PT
    has_res = residual is not None

    blk = pl.BlockSpec((1, PT, Cpad), lambda n, p: (n, p, 0))
    aff_spec = pl.BlockSpec((1, 8, Cpad), lambda n, p: (n, 0, 0))
    in_specs = [blk, aff_spec]
    args = [y, aff.astype(jnp.float32)]
    if has_res:
        in_specs.append(blk)
        args.append(residual.astype(y.dtype))

    kernel = functools.partial(_norm_act_kernel, act=act, has_res=has_res)
    out = pl.pallas_call(
        kernel,
        out_shape=jax.ShapeDtypeStruct((N, Ppad, Cpad), out_dtype),
        grid_spec=pltpu.PrefetchScalarGridSpec(
            num_scalar_prefetch=0,
            grid=(N, n_p),
            in_specs=in_specs,
            out_specs=blk,
        ),
        compiler_params=pltpu.CompilerParams(
            dimension_semantics=("parallel", "parallel"),
            vmem_limit_bytes=VMEM_LIMIT,
        ),
    )(*args)
    if Ppad != P:
        out = out[:, :P, :]
    return out


# ---------------------------------------------------------------------------
# JAX glue: stats finalization, padding, im2col, conv / conv-transpose drivers
# ---------------------------------------------------------------------------
def _reduce_stats(stats):
    # stats: (N, n_p, 8, Cpad) -> channel sum / sum-of-squares, each (N, Cpad)
    return stats[:, :, 0, :].sum(axis=1), stats[:, :, 1, :].sum(axis=1)


def _affine_from_sums(ssum, ssq, count):
    mean = ssum / count
    var = jnp.maximum(ssq / count - mean * mean, 0.0)   # biased, like PyTorch IN
    scale = jax.lax.rsqrt(var + EPS)
    shift = -mean * scale
    aff = jnp.stack([scale, shift], axis=1)             # (N, 2, Cpad)
    return jnp.pad(aff, ((0, 0), (0, 6), (0, 0)))       # (N, 8, Cpad)


def _im2col(xp, K, stride, Ho, Wo):
    # xp: (N, Hp, Wp, C) already padded
    N, _, _, C = xp.shape
    cols = []
    for kh in range(K):
        for kw in range(K):
            cols.append(xp[:, kh:kh + (Ho - 1) * stride + 1:stride,
                              kw:kw + (Wo - 1) * stride + 1:stride, :])
    patches = jnp.stack(cols, axis=3)                   # (N, Ho, Wo, K*K, C)
    return patches.reshape(N, Ho * Wo, K * K * C)


# TODO(synk): implicit im2col (halo-row DMA inside the kernel) for the 3x3/7x7
# convs to avoid the KH*KW patch-byte inflation in HBM.
def conv2d(x, w, bias, *, stride, padding, use_norm, act,
           residual=None, out_dtype=ACT_DTYPE, pad_mode="reflect"):
    # x: (N,H,W,Cact) possibly lane-padded; w: PyTorch Conv2d (Cout,Cin,K,K)
    Cout, Cin, KH, _ = w.shape
    if x.shape[-1] != Cin:
        x = x[..., :Cin]                 # drop zero lane-padding channels
    N, H, W, _ = x.shape
    xp = x
    if padding > 0:
        xp = jnp.pad(x, ((0, 0), (padding, padding), (padding, padding), (0, 0)),
                     mode=pad_mode)
    Ho = (H + 2 * padding - KH) // stride + 1
    Wo = (W + 2 * padding - KH) // stride + 1
    patches = _im2col(xp, KH, stride, Ho, Wo)
    # patch ordering (kh, kw, cin) -> w_mat[(kh*K+kw)*Cin + c, cout]
    w_mat = jnp.transpose(w, (2, 3, 1, 0)).reshape(KH * KH * Cin, Cout)

    if not use_norm:
        y = conv_matmul(patches, w_mat, bias, use_norm=False, act=act,
                        out_dtype=out_dtype)
        return y.reshape(N, Ho, Wo, y.shape[-1])

    y, stats = conv_matmul(patches, w_mat, bias, use_norm=True, act="none",
                           out_dtype=ACT_DTYPE)
    P = Ho * Wo
    ssum, ssq = _reduce_stats(stats)
    aff = _affine_from_sums(ssum, ssq, float(P))
    res = None
    if residual is not None:
        res = residual.reshape(N, P, residual.shape[-1])
    out = instance_norm_act(y, aff, res, act=act, out_dtype=out_dtype)
    return out.reshape(N, Ho, Wo, out.shape[-1])


def conv_transpose2d(x, w, bias, *, act="relu", out_dtype=ACT_DTYPE):
    """ConvTranspose2d(k=3, stride=2, padding=1, output_padding=1) + IN + act
    via pixel-shuffle decomposition into 4 sub-convolutions."""
    Cin, Cout, K, _ = w.shape            # PyTorch ConvTranspose2d layout
    assert K == 3
    if x.shape[-1] != Cin:
        x = x[..., :Cin]
    N, H, W, _ = x.shape
    Ho, Wo = 2 * H, 2 * W
    xe = jnp.pad(x, ((0, 0), (0, 1), (0, 1), (0, 0)))   # zero halo right/bottom

    phase_y = []
    sums = None
    sqs = None
    for a in (0, 1):
        # out row 2m+a:  a=0 -> (dr=0, kh=1);  a=1 -> (dr=0, kh=2), (dr=1, kh=0)
        drs = [(0, 1)] if a == 0 else [(0, 2), (1, 0)]
        for c in (0, 1):
            dcs = [(0, 1)] if c == 0 else [(0, 2), (1, 0)]
            cols, wrows = [], []
            for dr, kh in drs:
                for dc, kw in dcs:
                    cols.append(
                        xe[:, dr:dr + H, dc:dc + W, :].reshape(N, H * W, Cin))
                    wrows.append(w[:, :, kh, kw])        # (Cin, Cout)
            patches = jnp.concatenate(cols, axis=-1)
            w_mat = jnp.concatenate(wrows, axis=0)
            yk, st = conv_matmul(patches, w_mat, bias, use_norm=True,
                                 act="none", out_dtype=ACT_DTYPE)
            phase_y.append(yk)                           # (N, H*W, Cpad)
            s0, s1 = _reduce_stats(st)
            sums = s0 if sums is None else sums + s0
            sqs = s1 if sqs is None else sqs + s1

    Cpad = phase_y[0].shape[-1]
    aff = _affine_from_sums(sums, sqs, float(Ho * Wo))

    p00, p01, p10, p11 = [p.reshape(N, H, W, Cpad) for p in phase_y]
    y = jnp.stack([jnp.stack([p00, p01], axis=3),
                   jnp.stack([p10, p11], axis=3)], axis=2)   # (N,H,2,W,2,C)
    y = y.reshape(N, Ho * Wo, Cpad)
    out = instance_norm_act(y, aff, act=act, out_dtype=out_dtype)
    return out.reshape(N, Ho, Wo, Cpad)


# ---------------------------------------------------------------------------
# Generator (deterministic synthetic parameters)
# ---------------------------------------------------------------------------
class Generator:
    def __init__(self, img_channels, num_features=64, num_residuals=9, *, key):
        self.img_channels = img_channels
        n_keys = 2 * (2 + 2 + 2 * num_residuals + 2 + 1)
        keys = iter(jax.random.split(key, n_keys))

        def conv_p(cin, cout, k):
            fan_in = cin * k * k
            w = jax.random.normal(next(keys), (cout, cin, k, k), jnp.float32)
            w = w * (1.0 / jnp.sqrt(float(fan_in)))
            b = jax.random.normal(next(keys), (cout,), jnp.float32) * 0.01
            return w, b

        def convT_p(cin, cout, k):
            fan_in = cin * k * k
            w = jax.random.normal(next(keys), (cin, cout, k, k), jnp.float32)
            w = w * (1.0 / jnp.sqrt(float(fan_in)))
            b = jax.random.normal(next(keys), (cout,), jnp.float32) * 0.01
            return w, b

        nf = num_features
        self.initial = conv_p(img_channels, nf, 7)
        self.down = [conv_p(nf, nf * 2, 3), conv_p(nf * 2, nf * 4, 3)]
        self.res = [(conv_p(nf * 4, nf * 4, 3), conv_p(nf * 4, nf * 4, 3))
                    for _ in range(num_residuals)]
        self.up = [convT_p(nf * 4, nf * 2, 3), convT_p(nf * 2, nf, 3)]
        self.last = conv_p(nf, img_channels, 7)

    def __call__(self, x):
        # x: NHWC float; inter-layer activations are lane-padded bf16.
        x = x.astype(ACT_DTYPE)
        w, b = self.initial
        x = conv2d(x, w, b, stride=1, padding=3, use_norm=False, act="relu")
        for (w, b) in self.down:
            x = conv2d(x, w, b, stride=2, padding=1, use_norm=True, act="relu")
        for (p1, p2) in self.res:
            h = conv2d(x, p1[0], p1[1], stride=1, padding=1,
                       use_norm=True, act="relu")
            x = conv2d(h, p2[0], p2[1], stride=1, padding=1,
                       use_norm=True, act="none", residual=x)
        for (w, b) in self.up:
            x = conv_transpose2d(x, w, b, act="relu")
        w, b = self.last
        x = conv2d(x, w, b, stride=1, padding=3, use_norm=False, act="tanh",
                   out_dtype=jnp.float32)
        return x[..., :self.img_channels]    # drop channel lane-padding


if __name__ == "__main__":
    key = jax.random.PRNGKey(0)
    k_param, k_x = jax.random.split(key)

    # small shapes consistent with the module's constructor arguments
    N, C, H, W = 2, 3, 16, 16
    gen = Generator(img_channels=C, num_features=8, num_residuals=2, key=k_param)

    x_nchw = jax.random.normal(k_x, (N, C, H, W), jnp.float32)
    x_nhwc = jnp.transpose(x_nchw, (0, 2, 3, 1))   # NCHW -> NHWC

    y = jax.block_until_ready(gen(x_nhwc))

    assert y.shape == (N, H, W, C), y.shape
    assert bool(jnp.all(jnp.isfinite(y)))
    assert bool(jnp.all(jnp.abs(y) <= 1.0 + 1e-6))   # tanh output range
    print("KERNEL_OK")
</pallas_src>

<mosaic_0001>
module attributes {stable_mosaic.version = 11 : i64} {
  func.func @_conv_mm_kernel(%arg0: i32, %arg1: i32, %arg2: i32, %arg3: memref<1x256x256xbf16, #tpu.memory_space<vmem>>, %arg4: memref<256x128xbf16, #tpu.memory_space<vmem>>, %arg5: memref<1x128xf32, #tpu.memory_space<vmem>>, %arg6: memref<1x256x128xbf16, #tpu.memory_space<vmem>>, %arg7: memref<256x128xf32, #tpu.memory_space<vmem>>) attributes {dimension_semantics = [#tpu.dimension_semantics<parallel>, #tpu.dimension_semantics<parallel>, #tpu.dimension_semantics<arbitrary>], iteration_bounds = array<i64: 2, 1, 1>, scalar_prefetch = 0 : i64, scratch_operands = 1 : i64, tpu.core_type = #tpu.core_type<tc>, window_params = [{transform_indices = @transform_0, window_bounds = array<i64: 1, 256, 256>}, {transform_indices = @transform_1, window_bounds = array<i64: 256, 128>}, {pipeline_mode = #tpu.pipeline_mode<synchronous>, transform_indices = @transform_2, window_bounds = array<i64: 1, 128>}, {transform_indices = @transform_3, window_bounds = array<i64: 1, 256, 128>}]} {
    %c0_i32 = arith.constant 0 : i32
    %0 = arith.cmpi eq, %arg2, %c0_i32 : i32
    %1 = arith.extui %0 : i1 to i32
    %c0_i32_0 = arith.constant 0 : i32
    %2 = arith.cmpi ne, %1, %c0_i32_0 : i32
    scf.if %2 {
      %cst_11 = arith.constant 0.000000e+00 : f32
      %13 = vector.broadcast %cst_11 : f32 to vector<256x128xf32>
      %c0_12 = arith.constant 0 : index
      %c0_13 = arith.constant 0 : index
      %14 = vector.load %arg7[%c0_12, %c0_13] : memref<256x128xf32, #tpu.memory_space<vmem>>, vector<256x128xf32>
      tpu.vector_store %arg7[%c0_12, %c0_13], %13 {strides = array<i32>} : memref<256x128xf32, #tpu.memory_space<vmem>>, vector<256x128xf32>,
    } else {
    }
    %c0 = arith.constant 0 : index
    %c0_1 = arith.constant 0 : index
    %3 = vector.load %arg7[%c0, %c0_1] : memref<256x128xf32, #tpu.memory_space<vmem>>, vector<256x128xf32>
    %c0_2 = arith.constant 0 : index
    %c0_3 = arith.constant 0 : index
    %c0_4 = arith.constant 0 : index
    %4 = vector.load %arg3[%c0_2, %c0_3, %c0_4] : memref<1x256x256xbf16, #tpu.memory_space<vmem>>, vector<1x256x256xbf16>
    %5 = vector.shape_cast %4 : vector<1x256x256xbf16> to vector<256x256xbf16>
    %c0_5 = arith.constant 0 : index
    %c0_6 = arith.constant 0 : index
    %6 = vector.load %arg4[%c0_5, %c0_6] : memref<256x128xbf16, #tpu.memory_space<vmem>>, vector<256x128xbf16>
    %cst = arith.constant dense<0.000000e+00> : vector<256x128xf32>
    %7 = tpu.matmul %5, %6, %cst {dimension_numbers = #tpu.dot_dimension_numbers<[1], [0], [0], [1], [0, 0, 1, 1], [], []>} : vector<256x256xbf16>, vector<256x128xbf16>, vector<256x128xf32> -> vector<256x128xf32>
    %8 = arith.addf %3, %7 : vector<256x128xf32>
    %c0_7 = arith.constant 0 : index
    %c0_8 = arith.constant 0 : index
    %9 = vector.load %arg7[%c0_7, %c0_8] : memref<256x128xf32, #tpu.memory_space<vmem>>, vector<256x128xf32>
    tpu.vector_store %arg7[%c0_7, %c0_8], %8 {strides = array<i32>} : memref<256x128xf32, #tpu.memory_space<vmem>>, vector<256x128xf32>,
    %c0_i32_9 = arith.constant 0 : i32
    %10 = arith.cmpi eq, %arg2, %c0_i32_9 : i32
    %11 = arith.extui %10 : i1 to i32
    %c0_i32_10 = arith.constant 0 : i32
    %12 = arith.cmpi ne, %11, %c0_i32_10 : i32
    scf.if %12 {
      %c0_11 = arith.constant 0 : index
      %c0_12 = arith.constant 0 : index
      %13 = vector.load %arg7[%c0_11, %c0_12] : memref<256x128xf32, #tpu.memory_space<vmem>>, vector<256x128xf32>
      %c0_13 = arith.constant 0 : index
      %c0_14 = arith.constant 0 : index
      %14 = vector.load %arg5[%c0_13, %c0_14] : memref<1x128xf32, #tpu.memory_space<vmem>>, vector<1x128xf32>
      %15 = vector.broadcast %14 : vector<1x128xf32> to vector<256x128xf32>
      %16 = arith.addf %13, %15 : vector<256x128xf32>
      %cst_15 = arith.constant 0.000000e+00 : f32
      %17 = vector.broadcast %cst_15 : f32 to vector<256x128xf32>
      %18 = arith.maximumf %16, %17 : vector<256x128xf32>
      %19 = arith.truncf %18 : vector<256x128xf32> to vector<256x128xbf16>
      %c0_16 = arith.constant 0 : index
      %c0_17 = arith.constant 0 : index
      %c0_18 = arith.constant 0 : index
      %20 = vector.load %arg6[%c0_16, %c0_17, %c0_18] : memref<1x256x128xbf16, #tpu.memory_space<vmem>>, vector<1x256x128xbf16>
      %21 = vector.shape_cast %20 : vector<1x256x128xbf16> to vector<256x128xbf16>
      %22 = vector.shape_cast %19 : vector<256x128xbf16> to vector<1x256x128xbf16>
      tpu.vector_store %arg6[%c0_16, %c0_17, %c0_18], %22 {strides = array<i32>} : memref<1x256x128xbf16, #tpu.memory_space<vmem>>, vector<1x256x128xbf16>,
    } else {
    }
    return
  }
  func.func @transform_0(%arg0: i32, %arg1: i32, %arg2: i32) -> (i32, i32, i32) {
    %c0_i32 = arith.constant 0 : i32
    return %arg0, %arg1, %arg2 : i32, i32, i32
  }
  func.func @transform_1(%arg0: i32, %arg1: i32, %arg2: i32) -> (i32, i32) {
    %c0_i32 = arith.constant 0 : i32
    %c0_i32_0 = arith.constant 0 : i32
    return %arg2, %c0_i32 : i32, i32
  }
  func.func @transform_2(%arg0: i32, %arg1: i32, %arg2: i32) -> (i32, i32) {
    %c0_i32 = arith.constant 0 : i32
    %c0_i32_0 = arith.constant 0 : i32
    %c0_i32_1 = arith.constant 0 : i32
    return %c0_i32, %c0_i32_0 : i32, i32
  }
  func.func @transform_3(%arg0: i32, %arg1: i32, %arg2: i32) -> (i32, i32, i32) {
    %c0_i32 = arith.constant 0 : i32
    %c0_i32_0 = arith.constant 0 : i32
    return %arg0, %arg1, %c0_i32 : i32, i32, i32
  }
}

</mosaic_0001>

<llo_original>
// kernel: tpu_custom_call.1
$region0: #{tpu_custom_call.1}
  #allocation0 [shape = 'u32[]', space=smem, size = 0x4, offset = 0x4, fixed_abs, tag = 'smem constant byte address 0x4 - core index']
  #allocation1 [shape = 'u32[144,128]{1,0:T(1,128)}', space=vmem, size = 0x12000, scoped, tag = 'internal scratch']
  #allocation2 [shape = 'f32[256,128]{1,0:T(8,128)}', space=vmem, size = 0x20000, scoped, tag = 'scratch operand']
  %s0 = inlined_call_operand.hbm [shape: bf16[2,256,256], index: 0, kind: input, shape index: {}]
  %s1 = inlined_call_operand.hbm [shape: bf16[256,128], index: 1, kind: input, shape index: {}]
  %s2 = inlined_call_operand.vmem [shape: f32[1,128], index: 2, kind: input, shape index: {}]
  %s3 = inlined_call_operand.hbm [shape: bf16[2,256,128], index: 3, kind: output, shape index: {}]
  %s4 = sld [smem:[#allocation0]]
  $region61: #{tpu_custom_call.1} parent=0
    _
  %s6 = ssub.s32 1, %s4
  %s7 = scalar_select 0, %s6, %s4
  $region1: #{tpu_custom_call.1} parent=0
    #allocation3 [shape = 'u8[262144]{0}', space=vmem, size = 0x40000, scoped, tag = 'input window, operand 0']
    #allocation4 [shape = 's32[2]{0}', space=sflag, size = 0x8, scoped, tag = 'scoped memory for tpu_custom_call.1']
    #allocation5 [shape = 's32[2]{0}', space=sflag, size = 0x8, scoped, tag = 'scoped memory for tpu_custom_call.1']
    #allocation6 [shape = 'u8[65536]{0}', space=vmem, size = 0x10000, scoped, tag = 'input window, operand 1, single buffered']
    #allocation7 [shape = 's32[1]{0}', space=sflag, size = 0x4, scoped, tag = 'scoped memory for tpu_custom_call.1']
    #allocation8 [shape = 'u8[131072]{0}', space=vmem, size = 0x20000, scoped, tag = 'output window, operand 0']
    %8 = vsyncpa [#allocation4], 0
    %s9 = scalar_lea.sflag [#allocation4], 1
    %10 = vsyncpa %s9, 0
    %11 = vsyncpa [#allocation7], 0
    %12 = vsyncpa [#allocation5], 0
    %s13 = scalar_lea.sflag [#allocation5], 1
    %14 = vsyncpa %s13, 0
    loop: start=0, step=1, limit=4
    $region2: #{tpu_custom_call.1} parent=1 // loop_pre_header
      _
    $region3: #{tpu_custom_call.1} parent=1 // loop_header
      %s16 = sphi 0, %s20
      %p17 = scmp.ge.s32.totalorder %s16, 4
      %s23 = sphi 0, %s42
      %s24 = sphi 0, %s38
      %s25 = sphi 0, %s34
      %s26 = sphi 0, %s23
      %s27 = sphi 0, %s24
      %s28 = sphi 0, %s25
      %s29 = sphi 0, %s26
      %s30 = sphi 0, %s27
      %s31 = sphi 0, %s28
      %s49 = sphi 0, %s51
      %s52 = sphi 0, %s49
      %s53 = sphi 0, %s52
      %s69 = sphi 0, %s53
      %s75 = sphi 0, %s77
      %s78 = sphi 0, %s75
      %s79 = sphi 0, %s78
      %s95 = sphi 0, %s79
      %s99 = sphi 0, %s99
      %s101 = sphi 0, %s99
      %s102 = sphi 0, %s101
      %s116 = sphi 0, %s102
      %s124 = sphi 0, %s126
      %s127 = sphi 0, %s124
      %s128 = sphi 0, %s127
      %s144 = sphi 0, %s128
    $region4: #{tpu_custom_call.1} parent=1 // loop_header_branch
      %19 = sbr.rel (%p17) target = $region8
    $region5: #{tpu_custom_call.1} parent=1 // loop_body
      %s21 = ssub.s32 %s16, 1
      %s22 = ssub.s32 %s16, 2
      %s32 = sadd.s32 1, %s25
      %p33 = scmp.ge.s32.totalorder %s32, 1
      %s34 = scalar_select %p33, 0, %s32
      %s35 = sadd.s32 1, %s24
      %s36 = scalar_select %p33, %s35, %s24
      %p37 = scmp.ge.s32.totalorder %s36, 1
      %s38 = scalar_select %p37, 0, %s36
      %s39 = sadd.s32 1, %s23
      %s40 = scalar_select %p37, %s39, %s23
      %p41 = scmp.ge.s32.totalorder %s40, 2
      %s42 = scalar_select %p41, 0, %s40
      %s43 = ssub.s32 %s23, %s42
      %s44 = ssub.s32 %s24, %s38
      %s45 = sor.u32 %s43, %s44
      %s46 = ssub.s32 %s25, %s34
      %s47 = sor.u32 %s45, %s46
      %p48 = scmp.eq.s32.totalorder %s47, 0
      %s50 = sadd.s32 %s49, 1
      %s51 = scalar_select %p48, %s49, %s50
      %p54 = pneg %p48
      %p55 = scmp.eq.s32.totalorder %s16, 1
      %p56 = por %p54, %p55
      %p57 = scmp.ne.s32.totalorder %s49, %s52
      %p58 = scmp.eq.s32.totalorder %s16, 0
      %p59 = por %p57, %p58
      %p60 = scmp.ne.s32.totalorder %s49, %s52
      %p61 = scmp.eq.s32.totalorder %s21, 1
      %p62 = por %p60, %p61
      %p63 = scmp.ne.s32.totalorder %s52, %s53
      %p64 = scmp.eq.s32.totalorder %s21, 0
      %p65 = por %p63, %p64
      %p66 = scmp.ne.s32.totalorder %s52, %s53
      %p67 = scmp.eq.s32.totalorder %s22, 1
      %p68 = por %p66, %p67
      %p70 = scmp.ne.s32.totalorder %s53, %s69
      %p71 = scmp.eq.s32.totalorder %s22, 0
      %p72 = por %p70, %p71
      %s73 = ssub.s32 %s25, %s34
      %p74 = scmp.eq.s32.totalorder %s73, 0
      %s76 = sadd.s32 %s75, 1
      %s77 = scalar_select %p74, %s75, %s76
      %p80 = pneg %p74
      %p81 = scmp.eq.s32.totalorder %s16, 1
      %p82 = por %p80, %p81
      %p83 = scmp.ne.s32.totalorder %s75, %s78
      %p84 = scmp.eq.s32.totalorder %s16, 0
      %p85 = por %p83, %p84
      %p86 = scmp.ne.s32.totalorder %s75, %s78
      %p87 = scmp.eq.s32.totalorder %s21, 1
      %p88 = por %p86, %p87
      %p89 = scmp.ne.s32.totalorder %s78, %s79
      %p90 = scmp.eq.s32.totalorder %s21, 0
      %p91 = por %p89, %p90
      %p92 = scmp.ne.s32.totalorder %s78, %s79
      %p93 = scmp.eq.s32.totalorder %s22, 1
      %p94 = por %p92, %p93
      %p96 = scmp.ne.s32.totalorder %s79, %s95
      %p97 = scmp.eq.s32.totalorder %s22, 0
      %p98 = por %p96, %p97
      %s100 = sadd.s32 %s99, 1
      %p103 = scmp.eq.s32.totalorder %s16, 1
      %p104 = scmp.ne.s32.totalorder %s99, %s101
      %p105 = scmp.eq.s32.totalorder %s16, 0
      %p106 = por %p104, %p105
      %p107 = scmp.ne.s32.totalorder %s99, %s101
      %p108 = scmp.eq.s32.totalorder %s21, 1
      %p109 = por %p107, %p108
      %p110 = scmp.ne.s32.totalorder %s101, %s102
      %p111 = scmp.eq.s32.totalorder %s21, 0
      %p112 = por %p110, %p111
      %p113 = scmp.ne.s32.totalorder %s101, %s102
      %p114 = scmp.eq.s32.totalorder %s22, 1
      %p115 = por %p113, %p114
      %p117 = scmp.ne.s32.totalorder %s102, %s116
      %p118 = scmp.eq.s32.totalorder %s22, 0
      %p119 = por %p117, %p118
      %s120 = ssub.s32 %s23, %s42
      %s121 = ssub.s32 %s24, %s38
      %s122 = sor.u32 %s120, %s121
      %p123 = scmp.eq.s32.totalorder %s122, 0
      %s125 = sadd.s32 %s124, 1
      %s126 = scalar_select %p123, %s124, %s125
      %p129 = pneg %p123
      %p130 = scmp.eq.s32.totalorder %s16, 1
      %p131 = por %p129, %p130
      %p132 = scmp.ne.s32.totalorder %s124, %s127
      %p133 = scmp.eq.s32.totalorder %s16, 0
      %p134 = por %p132, %p133
      %p135 = scmp.ne.s32.totalorder %s124, %s127
      %p136 = scmp.eq.s32.totalorder %s21, 1
      %p137 = por %p135, %p136
      %p138 = scmp.ne.s32.totalorder %s127, %s128
      %p139 = scmp.eq.s32.totalorder %s21, 0
      %p140 = por %p138, %p139
      %p141 = scmp.ne.s32.totalorder %s127, %s128
      %p142 = scmp.eq.s32.totalorder %s22, 1
      %p143 = por %p141, %p142
      %p145 = scmp.ne.s32.totalorder %s128, %s144
      %p146 = scmp.eq.s32.totalorder %s22, 0
      %p147 = por %p145, %p146
      %p148 = scmp.le.s32.totalorder 1, %s16
      %p149 = scmp.lt.s32.totalorder %s16, 3
      %p150 = pnand %p148, %p149
      %p151 = pneg %p150
      // Predicated region
      $region9: #{tpu_custom_call.1} parent=5 // pred_check
        _
      $region10: #{tpu_custom_call.1} parent=5 // pred_check_branch
        %153 = sbr.rel (%p150) target = $region12
      $region11: #{tpu_custom_call.1} parent=5 // pred_region
        %s154 = ssub.s32 %s16, 1
        // Predicated region
        $region13: #{tpu_custom_call.1} parent=11 // pred_check
          %p155 = pneg %p91
        $region14: #{tpu_custom_call.1} parent=11 // pred_check_branch
          %157 = sbr.rel (%p155) target = $region16
        $region15: #{tpu_custom_call.1} parent=11 // pred_region
          %s158 = smul.u32 32, %s28
          %s160 = ssub.s32 2048, 2048
          %161 = vsyncadd [#allocation7], %s160
          %s162 = smul.addr %s158, 64
          %s163 = scalar_lea.hbm %s1, %s162
          %s164 = sshll.u32 [#allocation6], 4
          %s165 = int_to_ptr.vmem [resolvable:$true] %s164
          %170 = dma.hbm_to_vmem [thread:$0]  %s163, 2048, %s165, [#allocation7], 64, 64, 4
        $region16: #{tpu_custom_call.1} parent=11 // pred_fallthru
          _
        // Predicated region
        $region17: #{tpu_custom_call.1} parent=11 // pred_check
          %p171 = pneg %p112
        $region18: #{tpu_custom_call.1} parent=11 // pred_check_branch
          %173 = sbr.rel (%p171) target = $region20
        $region19: #{tpu_custom_call.1} parent=11 // pred_region
          _
        $region20: #{tpu_custom_call.1} parent=11 // pred_fallthru
          _
      $region12: #{tpu_custom_call.1} parent=5 // pred_fallthru
        _
      %p174 = scmp.lt.s32.totalorder %s16, 2
      // Predicated region
      $region21: #{tpu_custom_call.1} parent=5 // pred_check
        %p175 = pneg %p174
      $region22: #{tpu_custom_call.1} parent=5 // pred_check_branch
        %177 = sbr.rel (%p175) target = $region24
      $region23: #{tpu_custom_call.1} parent=5 // pred_region
        // Predicated region
        $region25: #{tpu_custom_call.1} parent=23 // pred_check
          %p178 = pneg %p59
        $region26: #{tpu_custom_call.1} parent=23 // pred_check_branch
          %180 = sbr.rel (%p178) target = $region28
        $region27: #{tpu_custom_call.1} parent=23 // pred_region
          %s181 = sand.u32 %s49, 1
          %s182 = scalar_lea.sflag [#allocation4], %s181
          %s183 = sand.u32 %s49, 1
          %s184 = smul.addr %s183, 256
          %s185 = scalar_lea.vmem [#allocation3], %s184
          %s186 = smul.u32 32, %s24
          %s187 = smul.u32 2, %s25
          %s189 = ssub.s32 4096, 4096
          %190 = vsyncadd %s182, %s189
          %s191 = smul.addr %s186, 2
          %s192 = sadd.s32 %s187, %s191
          %s193 = smul.addr %s23, 64
          %s194 = sadd.s32 %s192, %s193
          %s195 = smul.addr %s194, 64
          %s196 = scalar_lea.hbm %s0, %s195
          %s197 = sshll.u32 %s185, 4
          %s198 = int_to_ptr.vmem [resolvable:$true] %s197
          %203 = dma.hbm_to_vmem [thread:$0]  %s196, 4096, %s198, %s182, 128, 128, 8
        $region28: #{tpu_custom_call.1} parent=23 // pred_fallthru
          _
      $region24: #{tpu_custom_call.1} parent=5 // pred_fallthru
        _
      %p204 = scmp.le.s32.totalorder 1, %s16
      %p205 = scmp.lt.s32.totalorder %s16, 3
      %p206 = pnand %p204, %p205
      %p207 = pneg %p206
      // Predicated region
      $region29: #{tpu_custom_call.1} parent=5 // pred_check
        _
      $region30: #{tpu_custom_call.1} parent=5 // pred_check_branch
        %209 = sbr.rel (%p206) target = $region32
      $region31: #{tpu_custom_call.1} parent=5 // pred_region
        %s210 = ssub.s32 %s16, 1
        %s211 = sand.u32 %s52, 1
        %s212 = scalar_lea.sflag [#allocation4], %s211
        %s213 = sand.u32 %s52, 1
        %s214 = smul.addr %s213, 256
        %s215 = scalar_lea.vmem [#allocation3], %s214
        // Predicated region
        $region33: #{tpu_custom_call.1} parent=31 // pred_check
          %p216 = pneg %p65
        $region34: #{tpu_custom_call.1} parent=31 // pred_check_branch
          %218 = sbr.rel (%p216) target = $region36
        $region35: #{tpu_custom_call.1} parent=31 // pred_region
          %219 = dma.done %s212, 4096
        $region36: #{tpu_custom_call.1} parent=31 // pred_fallthru
          _
        // Predicated region
        $region37: #{tpu_custom_call.1} parent=31 // pred_check
          %p220 = pneg %p91
        $region38: #{tpu_custom_call.1} parent=31 // pred_check_branch
          %222 = sbr.rel (%p220) target = $region40
        $region39: #{tpu_custom_call.1} parent=31 // pred_region
          %223 = dma.done [#allocation7], 2048
        $region40: #{tpu_custom_call.1} parent=31 // pred_fallthru
          _
        %s224 = sand.u32 %s52, 1
        %s225 = scalar_lea.sflag [#allocation4], %s224
        %s226 = sand.u32 %s52, 1
        %s227 = smul.addr %s226, 256
        %s228 = scalar_lea.vmem [#allocation3], %s227
        %p229 = pneg %p65
        %p230 = pneg %p62
        %p231 = pneg %p91
        %p232 = pneg %p88
        %p233 = pneg %p112
        %p234 = pneg %p109
        %p235 = pneg %p140
        %p236 = pneg %p137
        %s237 = sand.u32 %s127, 1
        %s238 = scalar_lea.sflag [#allocation5], %s237
        %s239 = sand.u32 %s127, 1
        %s240 = smul.addr %s239, 128
        %s241 = scalar_lea.vmem [#allocation8], %s240
        %s242 = smul.u32 32, %s27
        %s243 = smul.u32 2, %s28
        %s244 = smul.u32 32, %s28
        %s245 = smul.u32 32, %s27
        %p247 = scmp.eq.s32.totalorder %s28, 0
        // Predicated region
        $region41: #{tpu_custom_call.1} parent=31 // pred_check
          %p248 = pneg %p247
        $region42: #{tpu_custom_call.1} parent=31 // pred_check_branch
          %250 = sbr.rel (%p248) target = $region44
        $region43: #{tpu_custom_call.1} parent=31 // pred_region
          %251 = vst [vmem:[#allocation2] sm:$0xff] 0.0
          %252 = vst [vmem:[#allocation2 + $0x8] sm:$0xff] 0.0
          %253 = vst [vmem:[#allocation2 + $0x10] sm:$0xff] 0.0
          %254 = vst [vmem:[#allocation2 + $0x18] sm:$0xff] 0.0
          %255 = vst [vmem:[#allocation2 + $0x20] sm:$0xff] 0.0
          %256 = vst [vmem:[#allocation2 + $0x28] sm:$0xff] 0.0
          %257 = vst [vmem:[#allocation2 + $0x30] sm:$0xff] 0.0
          %258 = vst [vmem:[#allocation2 + $0x38] sm:$0xff] 0.0
          %259 = vst [vmem:[#allocation2 + $0x40] sm:$0xff] 0.0
          %260 = vst [vmem:[#allocation2 + $0x48] sm:$0xff] 0.0
          %261 = vst [vmem:[#allocation2 + $0x50] sm:$0xff] 0.0
          %262 = vst [vmem:[#allocation2 + $0x58] sm:$0xff] 0.0
          %263 = vst [vmem:[#allocation2 + $0x60] sm:$0xff] 0.0
          %264 = vst [vmem:[#allocation2 + $0x68] sm:$0xff] 0.0
          %265 = vst [vmem:[#allocation2 + $0x70] sm:$0xff] 0.0
          %266 = vst [vmem:[#allocation2 + $0x78] sm:$0xff] 0.0
          %267 = vst [vmem:[#allocation2 + $0x80] sm:$0xff] 0.0
          %268 = vst [vmem:[#allocation2 + $0x88] sm:$0xff] 0.0
          %269 = vst [vmem:[#allocation2 + $0x90] sm:$0xff] 0.0
          %270 = vst [vmem:[#allocation2 + $0x98] sm:$0xff] 0.0
          %271 = vst [vmem:[#allocation2 + $0xa0] sm:$0xff] 0.0
          %272 = vst [vmem:[#allocation2 + $0xa8] sm:$0xff] 0.0
          %273 = vst [vmem:[#allocation2 + $0xb0] sm:$0xff] 0.0
          %274 = vst [vmem:[#allocation2 + $0xb8] sm:$0xff] 0.0
          %275 = vst [vmem:[#allocation2 + $0xc0] sm:$0xff] 0.0
          %276 = vst [vmem:[#allocation2 + $0xc8] sm:$0xff] 0.0
          %277 = vst [vmem:[#allocation2 + $0xd0] sm:$0xff] 0.0
          %278 = vst [vmem:[#allocation2 + $0xd8] sm:$0xff] 0.0
          %279 = vst [vmem:[#allocation2 + $0xe0] sm:$0xff] 0.0
          %280 = vst [vmem:[#allocation2 + $0xe8] sm:$0xff] 0.0
          %281 = vst [vmem:[#allocation2 + $0xf0] sm:$0xff] 0.0
          %282 = vst [vmem:[#allocation2 + $0xf8] sm:$0xff] 0.0
        $region44: #{tpu_custom_call.1} parent=31 // pred_fallthru
          _
        %v283 = vld [vmem:[#allocation2] sm:$0xff]
        %v284 = vld [vmem:[#allocation2 + $0x8] sm:$0xff]
        %v285 = vld [vmem:[#allocation2 + $0x10] sm:$0xff]
        %v286 = vld [vmem:[#allocation2 + $0x18] sm:$0xff]
        %v287 = vld [vmem:[#allocation2 + $0x20] sm:$0xff]
        %v288 = vld [vmem:[#allocation2 + $0x28] sm:$0xff]
        %v289 = vld [vmem:[#allocation2 + $0x30] sm:$0xff]
        %v290 = vld [vmem:[#allocation2 + $0x38] sm:$0xff]
        %v291 = vld [vmem:[#allocation2 + $0x40] sm:$0xff]
        %v292 = vld [vmem:[#allocation2 + $0x48] sm:$0xff]
        %v293 = vld [vmem:[#allocation2 + $0x50] sm:$0xff]
        %v294 = vld [vmem:[#allocation2 + $0x58] sm:$0xff]
        %v295 = vld [vmem:[#allocation2 + $0x60] sm:$0xff]
        %v296 = vld [vmem:[#allocation2 + $0x68] sm:$0xff]
        %v297 = vld [vmem:[#allocation2 + $0x70] sm:$0xff]
        %v298 = vld [vmem:[#allocation2 + $0x78] sm:$0xff]
        %v299 = vld [vmem:[#allocation2 + $0x80] sm:$0xff]
        %v300 = vld [vmem:[#allocation2 + $0x88] sm:$0xff]
        %v301 = vld [vmem:[#allocation2 + $0x90] sm:$0xff]
        %v302 = vld [vmem:[#allocation2 + $0x98] sm:$0xff]
        %v303 = vld [vmem:[#allocation2 + $0xa0] sm:$0xff]
        %v304 = vld [vmem:[#allocation2 + $0xa8] sm:$0xff]
        %v305 = vld [vmem:[#allocation2 + $0xb0] sm:$0xff]
        %v306 = vld [vmem:[#allocation2 + $0xb8] sm:$0xff]
        %v307 = vld [vmem:[#allocation2 + $0xc0] sm:$0xff]
        %v308 = vld [vmem:[#allocation2 + $0xc8] sm:$0xff]
        %v309 = vld [vmem:[#allocation2 + $0xd0] sm:$0xff]
        %v310 = vld [vmem:[#allocation2 + $0xd8] sm:$0xff]
        %v311 = vld [vmem:[#allocation2 + $0xe0] sm:$0xff]
        %v312 = vld [vmem:[#allocation2 + $0xe8] sm:$0xff]
        %v313 = vld [vmem:[#allocation2 + $0xf0] sm:$0xff]
        %v314 = vld [vmem:[#allocation2 + $0xf8] sm:$0xff]
        %v315 = vld [vmem:[%s215] sm:$0xff]
        %v316 = vld [vmem:[%s215 + $0x8] sm:$0xff]
        %v317 = vld [vmem:[%s215 + $0x10] sm:$0xff]
        %v318 = vld [vmem:[%s215 + $0x18] sm:$0xff]
        %v319 = vld [vmem:[%s215 + $0x20] sm:$0xff]
        %v320 = vld [vmem:[%s215 + $0x28] sm:$0xff]
        %v321 = vld [vmem:[%s215 + $0x30] sm:$0xff]
        %v322 = vld [vmem:[%s215 + $0x38] sm:$0xff]
        %v323 = vld [vmem:[%s215 + $0x40] sm:$0xff]
        %v324 = vld [vmem:[%s215 + $0x48] sm:$0xff]
        %v325 = vld [vmem:[%s215 + $0x50] sm:$0xff]
        %v326 = vld [vmem:[%s215 + $0x58] sm:$0xff]
        %v327 = vld [vmem:[%s215 + $0x60] sm:$0xff]
        %v328 = vld [vmem:[%s215 + $0x68] sm:$0xff]
        %v329 = vld [vmem:[%s215 + $0x70] sm:$0xff]
        %v330 = vld [vmem:[%s215 + $0x78] sm:$0xff]
        %v331 = vld [vmem:[%s215 + $0x80] sm:$0xff]
        %v332 = vld [vmem:[%s215 + $0x88] sm:$0xff]
        %v333 = vld [vmem:[%s215 + $0x90] sm:$0xff]
        %v334 = vld [vmem:[%s215 + $0x98] sm:$0xff]
        %v335 = vld [vmem:[%s215 + $0xa0] sm:$0xff]
        %v336 = vld [vmem:[%s215 + $0xa8] sm:$0xff]
        %v337 = vld [vmem:[%s215 + $0xb0] sm:$0xff]
        %v338 = vld [vmem:[%s215 + $0xb8] sm:$0xff]
        %v339 = vld [vmem:[%s215 + $0xc0] sm:$0xff]
        %v340 = vld [vmem:[%s215 + $0xc8] sm:$0xff]
        %v341 = vld [vmem:[%s215 + $0xd0] sm:$0xff]
        %v342 = vld [vmem:[%s215 + $0xd8] sm:$0xff]
        %v343 = vld [vmem:[%s215 + $0xe0] sm:$0xff]
        %v344 = vld [vmem:[%s215 + $0xe8] sm:$0xff]
        %v345 = vld [vmem:[%s215 + $0xf0] sm:$0xff]
        %v346 = vld [vmem:[%s215 + $0xf8] sm:$0xff]
        %v347 = vld [vmem:[#allocation6] sm:$0xf]
        %v348 = vld [vmem:[#allocation6 + $0x4] sm:$0xf]
        %v349 = vld [vmem:[#allocation6 + $0x8] sm:$0xf]
        %v350 = vld [vmem:[#allocation6 + $0xc] sm:$0xf]
        %v351 = vld [vmem:[#allocation6 + $0x10] sm:$0xf]
        %v352 = vld [vmem:[#allocation6 + $0x14] sm:$0xf]
        %v353 = vld [vmem:[#allocation6 + $0x18] sm:$0xf]
        %v354 = vld [vmem:[#allocation6 + $0x1c] sm:$0xf]
        %v355 = vld [vmem:[#allocation6 + $0x20] sm:$0xf]
        %v356 = vld [vmem:[#allocation6 + $0x24] sm:$0xf]
        %v357 = vld [vmem:[#allocation6 + $0x28] sm:$0xf]
        %v358 = vld [vmem:[#allocation6 + $0x2c] sm:$0xf]
        %v359 = vld [vmem:[#allocation6 + $0x30] sm:$0xf]
        %v360 = vld [vmem:[#allocation6 + $0x34] sm:$0xf]
        %v361 = vld [vmem:[#allocation6 + $0x38] sm:$0xf]
        %v362 = vld [vmem:[#allocation6 + $0x3c] sm:$0xf]
        %v363 = vld [vmem:[#allocation6 + $0x40] sm:$0xf]
        %v364 = vld [vmem:[#allocation6 + $0x44] sm:$0xf]
        %v365 = vld [vmem:[#allocation6 + $0x48] sm:$0xf]
        %v366 = vld [vmem:[#allocation6 + $0x4c] sm:$0xf]
        %v367 = vld [vmem:[#allocation6 + $0x50] sm:$0xf]
        %v368 = vld [vmem:[#allocation6 + $0x54] sm:$0xf]
        %v369 = vld [vmem:[#allocation6 + $0x58] sm:$0xf]
        %v370 = vld [vmem:[#allocation6 + $0x5c] sm:$0xf]
        %v371 = vld [vmem:[#allocation6 + $0x60] sm:$0xf]
        %v372 = vld [vmem:[#allocation6 + $0x64] sm:$0xf]
        %v373 = vld [vmem:[#allocation6 + $0x68] sm:$0xf]
        %v374 = vld [vmem:[#allocation6 + $0x6c] sm:$0xf]
        %v375 = vld [vmem:[#allocation6 + $0x70] sm:$0xf]
        %v376 = vld [vmem:[#allocation6 + $0x74] sm:$0xf]
        %v377 = vld [vmem:[#allocation6 + $0x78] sm:$0xf]
        %v378 = vld [vmem:[#allocation6 + $0x7c] sm:$0xf]
        %v411 = vunpack.c.l.b16 %v315
        %v412 = vunpack.c.h.b16 %v315
        %v413 = vunpack.c.l.b16 %v316
        %v414 = vunpack.c.h.b16 %v316
        %v415 = vunpack.c.l.b16 %v317
        %v416 = vunpack.c.h.b16 %v317
        %v417 = vunpack.c.l.b16 %v318
        %v418 = vunpack.c.h.b16 %v318
        %v419 = vunpack.c.l.b16 %v319
        %v420 = vunpack.c.h.b16 %v319
        %v421 = vunpack.c.l.b16 %v320
        %v422 = vunpack.c.h.b16 %v320
        %v423 = vunpack.c.l.b16 %v321
        %v424 = vunpack.c.h.b16 %v321
        %v425 = vunpack.c.l.b16 %v322
        %v426 = vunpack.c.h.b16 %v322
        %v427 = vunpack.c.l.b16 %v323
        %v428 = vunpack.c.h.b16 %v323
        %v429 = vunpack.c.l.b16 %v324
        %v430 = vunpack.c.h.b16 %v324
        %v431 = vunpack.c.l.b16 %v325
        %v432 = vunpack.c.h.b16 %v325
        %v433 = vunpack.c.l.b16 %v326
        %v434 = vunpack.c.h.b16 %v326
        %v435 = vunpack.c.l.b16 %v327
        %v436 = vunpack.c.h.b16 %v327
        %v437 = vunpack.c.l.b16 %v328
        %v438 = vunpack.c.h.b16 %v328
        %v439 = vunpack.c.l.b16 %v329
        %v440 = vunpack.c.h.b16 %v329
        %v441 = vunpack.c.l.b16 %v330
        %v442 = vunpack.c.h.b16 %v330
        %v443 = vunpack.c.l.b16 %v331
        %v444 = vunpack.c.h.b16 %v331
        %v445 = vunpack.c.l.b16 %v332
        %v446 = vunpack.c.h.b16 %v332
        %v447 = vunpack.c.l.b16 %v333
        %v448 = vunpack.c.h.b16 %v333
        %v449 = vunpack.c.l.b16 %v334
        %v450 = vunpack.c.h.b16 %v334
        %v451 = vunpack.c.l.b16 %v335
        %v452 = vunpack.c.h.b16 %v335
        %v453 = vunpack.c.l.b16 %v336
        %v454 = vunpack.c.h.b16 %v336
        %v455 = vunpack.c.l.b16 %v337
        %v456 = vunpack.c.h.b16 %v337
        %v457 = vunpack.c.l.b16 %v338
        %v458 = vunpack.c.h.b16 %v338
        %v459 = vunpack.c.l.b16 %v339
        %v460 = vunpack.c.h.b16 %v339
        %v461 = vunpack.c.l.b16 %v340
        %v462 = vunpack.c.h.b16 %v340
        %v463 = vunpack.c.l.b16 %v341
        %v464 = vunpack.c.h.b16 %v341
        %v465 = vunpack.c.l.b16 %v342
        %v466 = vunpack.c.h.b16 %v342
        %v467 = vunpack.c.l.b16 %v343
        %v468 = vunpack.c.h.b16 %v343
        %v469 = vunpack.c.l.b16 %v344
        %v470 = vunpack.c.h.b16 %v344
        %v471 = vunpack.c.l.b16 %v345
        %v472 = vunpack.c.h.b16 %v345
        %v473 = vunpack.c.l.b16 %v346
        %v474 = vunpack.c.h.b16 %v346
        %v475 = vpack.c.b16 %v413, %v411
        %v476 = vpack.c.b16 %v414, %v412
        %v477 = vpack.c.b16 %v417, %v415
        %v478 = vpack.c.b16 %v418, %v416
        %v479 = vpack.c.b16 %v421, %v419
        %v480 = vpack.c.b16 %v422, %v420
        %v481 = vpack.c.b16 %v425, %v423
        %v482 = vpack.c.b16 %v426, %v424
        %v483 = vpack.c.b16 %v429, %v427
        %v484 = vpack.c.b16 %v430, %v428
        %v485 = vpack.c.b16 %v433, %v431
        %v486 = vpack.c.b16 %v434, %v432
        %v487 = vpack.c.b16 %v437, %v435
        %v488 = vpack.c.b16 %v438, %v436
        %v489 = vpack.c.b16 %v441, %v439
        %v490 = vpack.c.b16 %v442, %v440
        %v491 = vpack.c.b16 %v445, %v443
        %v492 = vpack.c.b16 %v446, %v444
        %v493 = vpack.c.b16 %v449, %v447
        %v494 = vpack.c.b16 %v450, %v448
        %v495 = vpack.c.b16 %v453, %v451
        %v496 = vpack.c.b16 %v454, %v452
        %v497 = vpack.c.b16 %v457, %v455
        %v498 = vpack.c.b16 %v458, %v456
        %v499 = vpack.c.b16 %v461, %v459
        %v500 = vpack.c.b16 %v462, %v460
        %v501 = vpack.c.b16 %v465, %v463
        %v502 = vpack.c.b16 %v466, %v464
        %v503 = vpack.c.b16 %v469, %v467
        %v504 = vpack.c.b16 %v470, %v468
        %v505 = vpack.c.b16 %v473, %v471
        %v506 = vpack.c.b16 %v474, %v472
        %v571 = vunpack.c.l.b16 %v347
        %v572 = vunpack.c.l.b16 %v348
        %v573 = vunpack.c.l.b16 %v349
        %v574 = vunpack.c.l.b16 %v350
        %v575 = vunpack.c.l.b16 %v351
        %v576 = vunpack.c.l.b16 %v352
        %v577 = vunpack.c.l.b16 %v353
        %v578 = vunpack.c.l.b16 %v354
        %v579 = vunpack.c.l.b16 %v355
        %v580 = vunpack.c.l.b16 %v356
        %v581 = vunpack.c.l.b16 %v357
        %v582 = vunpack.c.l.b16 %v358
        %v583 = vunpack.c.l.b16 %v359
        %v584 = vunpack.c.l.b16 %v360
        %v585 = vunpack.c.l.b16 %v361
        %v586 = vunpack.c.l.b16 %v362
        %v587 = vunpack.c.l.b16 %v363
        %v588 = vunpack.c.l.b16 %v364
        %v589 = vunpack.c.l.b16 %v365
        %v590 = vunpack.c.l.b16 %v366
        %v591 = vunpack.c.l.b16 %v367
        %v592 = vunpack.c.l.b16 %v368
        %v593 = vunpack.c.l.b16 %v369
        %v594 = vunpack.c.l.b16 %v370
        %v595 = vunpack.c.l.b16 %v371
        %v596 = vunpack.c.l.b16 %v372
        %v597 = vunpack.c.l.b16 %v373
        %v598 = vunpack.c.l.b16 %v374
        %v599 = vunpack.c.l.b16 %v375
        %v600 = vunpack.c.l.b16 %v376
        %v601 = vunpack.c.l.b16 %v377
        %v602 = vunpack.c.l.b16 %v378
        %v603 = vpack.c.b16 %v572, %v571
        %v604 = vpack.c.b16 %v574, %v573
        %v605 = vpack.c.b16 %v576, %v575
        %v606 = vpack.c.b16 %v578, %v577
        %v607 = vpack.c.b16 %v580, %v579
        %v608 = vpack.c.b16 %v582, %v581
        %v609 = vpack.c.b16 %v584, %v583
        %v610 = vpack.c.b16 %v586, %v585
        %v611 = vpack.c.b16 %v588, %v587
        %v612 = vpack.c.b16 %v590, %v589
        %v613 = vpack.c.b16 %v592, %v591
        %v614 = vpack.c.b16 %v594, %v593
        %v615 = vpack.c.b16 %v596, %v595
        %v616 = vpack.c.b16 %v598, %v597
        %v617 = vpack.c.b16 %v600, %v599
        %v618 = vpack.c.b16 %v602, %v601
        %635 = vmatprep.subr.bf16.mxu0 0
        %636 = vmatpush1.bf16.msra.mxu0 %v610
        %637 = vmatprep.subr.bf16.mxu0 0
        %638 = vmatpush1.bf16.msra.mxu0 %v609
        %639 = vmatprep.subr.bf16.mxu0 0
        %640 = vmatpush1.bf16.msra.mxu0 %v608
        %641 = vmatprep.subr.bf16.mxu0 0
        %642 = vmatpush1.bf16.msra.mxu0 %v607
        %643 = vmatprep.subr.bf16.mxu0 0
        %644 = vmatpush1.bf16.msra.mxu0 %v606
        %645 = vmatprep.subr.bf16.mxu0 0
        %646 = vmatpush1.bf16.msra.mxu0 %v605
        %647 = vmatprep.subr.bf16.mxu0 0
        %648 = vmatpush1.bf16.msra.mxu0 %v604
        %649 = vmatprep.subr.bf16.mxu0 0
        %650 = vmatpush1.bf16.msra.mxu0 %v603
        %651 = vmatprep.subr.bf16.mxu0 0
        %652 = vmatpush2.bf16.msra.mxu0 %v618
        %653 = vmatprep.subr.bf16.mxu0 0
        %654 = vmatpush2.bf16.msra.mxu0 %v617
        %655 = vmatprep.subr.bf16.mxu0 0
        %656 = vmatpush2.bf16.msra.mxu0 %v616
        %657 = vmatprep.subr.bf16.mxu0 0
        %658 = vmatpush2.bf16.msra.mxu0 %v615
        %659 = vmatprep.subr.bf16.mxu0 0
        %660 = vmatpush2.bf16.msra.mxu0 %v614
        %661 = vmatprep.subr.bf16.mxu0 0
        %662 = vmatpush2.bf16.msra.mxu0 %v613
        %663 = vmatprep.subr.bf16.mxu0 0
        %664 = vmatpush2.bf16.msra.mxu0 %v612
        %665 = vmatprep.subr.bf16.mxu0 0
        %666 = vmatpush2.bf16.msra.mxu0 %v611
        %667 = vmatprep.mubr.bf16.mxu0 %v476
        %668 = vmatmul.mubr.bf16.gmra.mxu0 %v475
        %v669 = vpop.f32.mrf.mxu0
        %v670 = vadd.f32 0.0, %v669
        %v671 = vpop.f32.mrf.mxu0
        %v672 = vpop.f32.mrf.mxu0
        %v673 = vadd.f32 0.0, %v672
        %v674 = vpop.f32.mrf.mxu0
        %675 = vmatprep.mubr.bf16.mxu0 %v478
        %676 = vmatmul.mubr.bf16.gmra.mxu0 %v477
        %v677 = vpop.f32.mrf.mxu0
        %v678 = vadd.f32 0.0, %v677
        %v679 = vpop.f32.mrf.mxu0
        %v680 = vpop.f32.mrf.mxu0
        %v681 = vadd.f32 0.0, %v680
        %v682 = vpop.f32.mrf.mxu0
        %683 = vmatprep.mubr.bf16.mxu0 %v480
        %684 = vmatmul.mubr.bf16.gmra.mxu0 %v479
        %v685 = vpop.f32.mrf.mxu0
        %v686 = vadd.f32 0.0, %v685
        %v687 = vpop.f32.mrf.mxu0
        %v688 = vpop.f32.mrf.mxu0
        %v689 = vadd.f32 0.0, %v688
        %v690 = vpop.f32.mrf.mxu0
        %691 = vmatprep.mubr.bf16.mxu0 %v482
        %692 = vmatmul.mubr.bf16.gmra.mxu0 %v481
        %v693 = vpop.f32.mrf.mxu0
        %v694 = vadd.f32 0.0, %v693
        %v695 = vpop.f32.mrf.mxu0
        %v696 = vpop.f32.mrf.mxu0
        %v697 = vadd.f32 0.0, %v696
        %v698 = vpop.f32.mrf.mxu0
        %699 = vmatprep.mubr.bf16.mxu0 %v484
        %700 = vmatmul.mubr.bf16.gmra.mxu0 %v483
        %v701 = vpop.f32.mrf.mxu0
        %v702 = vadd.f32 0.0, %v701
        %v703 = vpop.f32.mrf.mxu0
        %v704 = vpop.f32.mrf.mxu0
        %v705 = vadd.f32 0.0, %v704
        %v706 = vpop.f32.mrf.mxu0
        %707 = vmatprep.mubr.bf16.mxu0 %v486
        %708 = vmatmul.mubr.bf16.gmra.mxu0 %v485
        %v709 = vpop.f32.mrf.mxu0
        %v710 = vadd.f32 0.0, %v709
        %v711 = vpop.f32.mrf.mxu0
        %v712 = vpop.f32.mrf.mxu0
        %v713 = vadd.f32 0.0, %v712
        %v714 = vpop.f32.mrf.mxu0
        %715 = vmatprep.mubr.bf16.mxu0 %v488
        %716 = vmatmul.mubr.bf16.gmra.mxu0 %v487
        %v717 = vpop.f32.mrf.mxu0
        %v718 = vadd.f32 0.0, %v717
        %v719 = vpop.f32.mrf.mxu0
        %v720 = vpop.f32.mrf.mxu0
        %v721 = vadd.f32 0.0, %v720
        %v722 = vpop.f32.mrf.mxu0
        %723 = vmatprep.mubr.bf16.mxu0 %v490
        %724 = vmatmul.mubr.bf16.gmra.mxu0 %v489
        %v725 = vpop.f32.mrf.mxu0
        %v726 = vadd.f32 0.0, %v725
        %v727 = vpop.f32.mrf.mxu0
        %v728 = vpop.f32.mrf.mxu0
        %v729 = vadd.f32 0.0, %v728
        %v730 = vpop.f32.mrf.mxu0
        %731 = vmatprep.mubr.bf16.mxu0 %v492
        %732 = vmatmul.mubr.bf16.gmra.mxu0 %v491
        %v733 = vpop.f32.mrf.mxu0
        %v734 = vadd.f32 0.0, %v733
        %v735 = vpop.f32.mrf.mxu0
        %v736 = vpop.f32.mrf.mxu0
        %v737 = vadd.f32 0.0, %v736
        %v738 = vpop.f32.mrf.mxu0
        %739 = vmatprep.mubr.bf16.mxu0 %v494
        %740 = vmatmul.mubr.bf16.gmra.mxu0 %v493
        %v741 = vpop.f32.mrf.mxu0
        %v742 = vadd.f32 0.0, %v741
        %v743 = vpop.f32.mrf.mxu0
        %v744 = vpop.f32.mrf.mxu0
        %v745 = vadd.f32 0.0, %v744
        %v746 = vpop.f32.mrf.mxu0
        %747 = vmatprep.mubr.bf16.mxu0 %v496
        %748 = vmatmul.mubr.bf16.gmra.mxu0 %v495
        %v749 = vpop.f32.mrf.mxu0
        %v750 = vadd.f32 0.0, %v749
        %v751 = vpop.f32.mrf.mxu0
        %v752 = vpop.f32.mrf.mxu0
        %v753 = vadd.f32 0.0, %v752
        %v754 = vpop.f32.mrf.mxu0
        %755 = vmatprep.mubr.bf16.mxu0 %v498
        %756 = vmatmul.mubr.bf16.gmra.mxu0 %v497
        %v757 = vpop.f32.mrf.mxu0
        %v758 = vadd.f32 0.0, %v757
        %v759 = vpop.f32.mrf.mxu0
        %v760 = vpop.f32.mrf.mxu0
        %v761 = vadd.f32 0.0, %v760
        %v762 = vpop.f32.mrf.mxu0
        %763 = vmatprep.mubr.bf16.mxu0 %v500
        %764 = vmatmul.mubr.bf16.gmra.mxu0 %v499
        %v765 = vpop.f32.mrf.mxu0
        %v766 = vadd.f32 0.0, %v765
        %v767 = vpop.f32.mrf.mxu0
        %v768 = vpop.f32.mrf.mxu0
        %v769 = vadd.f32 0.0, %v768
        %v770 = vpop.f32.mrf.mxu0
        %771 = vmatprep.mubr.bf16.mxu0 %v502
        %772 = vmatmul.mubr.bf16.gmra.mxu0 %v501
        %v773 = vpop.f32.mrf.mxu0
        %v774 = vadd.f32 0.0, %v773
        %v775 = vpop.f32.mrf.mxu0
        %v776 = vpop.f32.mrf.mxu0
        %v777 = vadd.f32 0.0, %v776
        %v778 = vpop.f32.mrf.mxu0
        %779 = vmatprep.mubr.bf16.mxu0 %v504
        %780 = vmatmul.mubr.bf16.gmra.mxu0 %v503
        %v781 = vpop.f32.mrf.mxu0
        %v782 = vadd.f32 0.0, %v781
        %v783 = vpop.f32.mrf.mxu0
        %v784 = vpop.f32.mrf.mxu0
        %v785 = vadd.f32 0.0, %v784
        %v786 = vpop.f32.mrf.mxu0
        %787 = vmatprep.mubr.bf16.mxu0 %v506
        %788 = vmatmul.mubr.bf16.gmra.mxu0 %v505
        %v789 = vpop.f32.mrf.mxu0
        %v790 = vadd.f32 0.0, %v789
        %v791 = vpop.f32.mrf.mxu0
        %v792 = vpop.f32.mrf.mxu0
        %v793 = vadd.f32 0.0, %v792
        %v794 = vpop.f32.mrf.mxu0
        %795 = vdwg.mxu0
        %v796 = vadd.f32 %v283, %v670
        %v797 = vadd.f32 %v284, %v673
        %v798 = vadd.f32 %v285, %v678
        %v799 = vadd.f32 %v286, %v681
        %v800 = vadd.f32 %v287, %v686
        %v801 = vadd.f32 %v288, %v689
        %v802 = vadd.f32 %v289, %v694
        %v803 = vadd.f32 %v290, %v697
        %v804 = vadd.f32 %v291, %v702
        %v805 = vadd.f32 %v292, %v705
        %v806 = vadd.f32 %v293, %v710
        %v807 = vadd.f32 %v294, %v713
        %v808 = vadd.f32 %v295, %v718
        %v809 = vadd.f32 %v296, %v721
        %v810 = vadd.f32 %v297, %v726
        %v811 = vadd.f32 %v298, %v729
        %v812 = vadd.f32 %v299, %v734
        %v813 = vadd.f32 %v300, %v737
        %v814 = vadd.f32 %v301, %v742
        %v815 = vadd.f32 %v302, %v745
        %v816 = vadd.f32 %v303, %v750
        %v817 = vadd.f32 %v304, %v753
        %v818 = vadd.f32 %v305, %v758
        %v819 = vadd.f32 %v306, %v761
        %v820 = vadd.f32 %v307, %v766
        %v821 = vadd.f32 %v308, %v769
        %v822 = vadd.f32 %v309, %v774
        %v823 = vadd.f32 %v310, %v777
        %v824 = vadd.f32 %v311, %v782
        %v825 = vadd.f32 %v312, %v785
        %v826 = vadd.f32 %v313, %v790
        %v827 = vadd.f32 %v314, %v793
        %828 = vst [vmem:[#allocation2] sm:$0xff] %v796
        %829 = vst [vmem:[#allocation2 + $0x8] sm:$0xff] %v797
        %830 = vst [vmem:[#allocation2 + $0x10] sm:$0xff] %v798
        %831 = vst [vmem:[#allocation2 + $0x18] sm:$0xff] %v799
        %832 = vst [vmem:[#allocation2 + $0x20] sm:$0xff] %v800
        %833 = vst [vmem:[#allocation2 + $0x28] sm:$0xff] %v801
        %834 = vst [vmem:[#allocation2 + $0x30] sm:$0xff] %v802
        %835 = vst [vmem:[#allocation2 + $0x38] sm:$0xff] %v803
        %836 = vst [vmem:[#allocation2 + $0x40] sm:$0xff] %v804
        %837 = vst [vmem:[#allocation2 + $0x48] sm:$0xff] %v805
        %838 = vst [vmem:[#allocation2 + $0x50] sm:$0xff] %v806
        %839 = vst [vmem:[#allocation2 + $0x58] sm:$0xff] %v807
        %840 = vst [vmem:[#allocation2 + $0x60] sm:$0xff] %v808
        %841 = vst [vmem:[#allocation2 + $0x68] sm:$0xff] %v809
        %842 = vst [vmem:[#allocation2 + $0x70] sm:$0xff] %v810
        %843 = vst [vmem:[#allocation2 + $0x78] sm:$0xff] %v811
        %844 = vst [vmem:[#allocation2 + $0x80] sm:$0xff] %v812
        %845 = vst [vmem:[#allocation2 + $0x88] sm:$0xff] %v813
        %846 = vst [vmem:[#allocation2 + $0x90] sm:$0xff] %v814
        %847 = vst [vmem:[#allocation2 + $0x98] sm:$0xff] %v815
        %848 = vst [vmem:[#allocation2 + $0xa0] sm:$0xff] %v816
        %849 = vst [vmem:[#allocation2 + $0xa8] sm:$0xff] %v817
        %850 = vst [vmem:[#allocation2 + $0xb0] sm:$0xff] %v818
        %851 = vst [vmem:[#allocation2 + $0xb8] sm:$0xff] %v819
        %852 = vst [vmem:[#allocation2 + $0xc0] sm:$0xff] %v820
        %853 = vst [vmem:[#allocation2 + $0xc8] sm:$0xff] %v821
        %854 = vst [vmem:[#allocation2 + $0xd0] sm:$0xff] %v822
        %855 = vst [vmem:[#allocation2 + $0xd8] sm:$0xff] %v823
        %856 = vst [vmem:[#allocation2 + $0xe0] sm:$0xff] %v824
        %857 = vst [vmem:[#allocation2 + $0xe8] sm:$0xff] %v825
        %858 = vst [vmem:[#allocation2 + $0xf0] sm:$0xff] %v826
        %859 = vst [vmem:[#allocation2 + $0xf8] sm:$0xff] %v827
        // Predicated region
        $region45: #{tpu_custom_call.1} parent=31 // pred_check
          %p860 = pneg %p247
        $region46: #{tpu_custom_call.1} parent=31 // pred_check_branch
          %862 = sbr.rel (%p860) target = $region48
        $region47: #{tpu_custom_call.1} parent=31 // pred_region
          %v863 = vld [vmem:[#allocation2] sm:$0xff]
          %v864 = vld [vmem:[#allocation2 + $0x8] sm:$0xff]
          %v865 = vld [vmem:[#allocation2 + $0x10] sm:$0xff]
          %v866 = vld [vmem:[#allocation2 + $0x18] sm:$0xff]
          %v867 = vld [vmem:[#allocation2 + $0x20] sm:$0xff]
          %v868 = vld [vmem:[#allocation2 + $0x28] sm:$0xff]
          %v869 = vld [vmem:[#allocation2 + $0x30] sm:$0xff]
          %v870 = vld [vmem:[#allocation2 + $0x38] sm:$0xff]
          %v871 = vld [vmem:[#allocation2 + $0x40] sm:$0xff]
          %v872 = vld [vmem:[#allocation2 + $0x48] sm:$0xff]
          %v873 = vld [vmem:[#allocation2 + $0x50] sm:$0xff]
          %v874 = vld [vmem:[#allocation2 + $0x58] sm:$0xff]
          %v875 = vld [vmem:[#allocation2 + $0x60] sm:$0xff]
          %v876 = vld [vmem:[#allocation2 + $0x68] sm:$0xff]
          %v877 = vld [vmem:[#allocation2 + $0x70] sm:$0xff]
          %v878 = vld [vmem:[#allocation2 + $0x78] sm:$0xff]
          %v879 = vld [vmem:[#allocation2 + $0x80] sm:$0xff]
          %v880 = vld [vmem:[#allocation2 + $0x88] sm:$0xff]
          %v881 = vld [vmem:[#allocation2 + $0x90] sm:$0xff]
          %v882 = vld [vmem:[#allocation2 + $0x98] sm:$0xff]
          %v883 = vld [vmem:[#allocation2 + $0xa0] sm:$0xff]
          %v884 = vld [vmem:[#allocation2 + $0xa8] sm:$0xff]
          %v885 = vld [vmem:[#allocation2 + $0xb0] sm:$0xff]
          %v886 = vld [vmem:[#allocation2 + $0xb8] sm:$0xff]
          %v887 = vld [vmem:[#allocation2 + $0xc0] sm:$0xff]
          %v888 = vld [vmem:[#allocation2 + $0xc8] sm:$0xff]
          %v889 = vld [vmem:[#allocation2 + $0xd0] sm:$0xff]
          %v890 = vld [vmem:[#allocation2 + $0xd8] sm:$0xff]
          %v891 = vld [vmem:[#allocation2 + $0xe0] sm:$0xff]
          %v892 = vld [vmem:[#allocation2 + $0xe8] sm:$0xff]
          %v893 = vld [vmem:[#allocation2 + $0xf0] sm:$0xff]
          %v894 = vld [vmem:[#allocation2 + $0xf8] sm:$0xff]
          %v895 = vld [vmem:[%s2] sm:$0x1]
          %v897 = vlaneseq
          %v898 = vshrl.u32 %v897, 7
          %v899 = vsub.s32 0, %v898
          %v900 = vrot.slane %v895, %v899
          %v902 = vadd.f32 %v863, %v900
          %v903 = vadd.f32 %v864, %v900
          %v904 = vadd.f32 %v865, %v900
          %v905 = vadd.f32 %v866, %v900
          %v906 = vadd.f32 %v867, %v900
          %v907 = vadd.f32 %v868, %v900
          %v908 = vadd.f32 %v869, %v900
          %v909 = vadd.f32 %v870, %v900
          %v910 = vadd.f32 %v871, %v900
          %v911 = vadd.f32 %v872, %v900
          %v912 = vadd.f32 %v873, %v900
          %v913 = vadd.f32 %v874, %v900
          %v914 = vadd.f32 %v875, %v900
          %v915 = vadd.f32 %v876, %v900
          %v916 = vadd.f32 %v877, %v900
          %v917 = vadd.f32 %v878, %v900
          %v918 = vadd.f32 %v879, %v900
          %v919 = vadd.f32 %v880, %v900
          %v920 = vadd.f32 %v881, %v900
          %v921 = vadd.f32 %v882, %v900
          %v922 = vadd.f32 %v883, %v900
          %v923 = vadd.f32 %v884, %v900
          %v924 = vadd.f32 %v885, %v900
          %v925 = vadd.f32 %v886, %v900
          %v926 = vadd.f32 %v887, %v900
          %v927 = vadd.f32 %v888, %v900
          %v928 = vadd.f32 %v889, %v900
          %v929 = vadd.f32 %v890, %v900
          %v930 = vadd.f32 %v891, %v900
          %v931 = vadd.f32 %v892, %v900
          %v932 = vadd.f32 %v893, %v900
          %v933 = vadd.f32 %v894, %v900
          %v934 = vmax.f32 %v902, 0.0
          %v935 = vmax.f32 %v903, 0.0
          %v936 = vmax.f32 %v904, 0.0
          %v937 = vmax.f32 %v905, 0.0
          %v938 = vmax.f32 %v906, 0.0
          %v939 = vmax.f32 %v907, 0.0
          %v940 = vmax.f32 %v908, 0.0
          %v941 = vmax.f32 %v909, 0.0
          %v942 = vmax.f32 %v910, 0.0
          %v943 = vmax.f32 %v911, 0.0
          %v944 = vmax.f32 %v912, 0.0
          %v945 = vmax.f32 %v913, 0.0
          %v946 = vmax.f32 %v914, 0.0
          %v947 = vmax.f32 %v915, 0.0
          %v948 = vmax.f32 %v916, 0.0
          %v949 = vmax.f32 %v917, 0.0
          %v950 = vmax.f32 %v918, 0.0
          %v951 = vmax.f32 %v919, 0.0
          %v952 = vmax.f32 %v920, 0.0
          %v953 = vmax.f32 %v921, 0.0
          %v954 = vmax.f32 %v922, 0.0
          %v955 = vmax.f32 %v923, 0.0
          %v956 = vmax.f32 %v924, 0.0
          %v957 = vmax.f32 %v925, 0.0
          %v958 = vmax.f32 %v926, 0.0
          %v959 = vmax.f32 %v927, 0.0
          %v960 = vmax.f32 %v928, 0.0
          %v961 = vmax.f32 %v929, 0.0
          %v962 = vmax.f32 %v930, 0.0
          %v963 = vmax.f32 %v931, 0.0
          %v964 = vmax.f32 %v932, 0.0
          %v965 = vmax.f32 %v933, 0.0
          %v966 = vpack.c.bf16 %v935, %v934
          %v967 = vpack.c.bf16 %v937, %v936
          %v968 = vpack.c.bf16 %v939, %v938
          %v969 = vpack.c.bf16 %v941, %v940
          %v970 = vpack.c.bf16 %v943, %v942
          %v971 = vpack.c.bf16 %v945, %v944
          %v972 = vpack.c.bf16 %v947, %v946
          %v973 = vpack.c.bf16 %v949, %v948
          %v974 = vpack.c.bf16 %v951, %v950
          %v975 = vpack.c.bf16 %v953, %v952
          %v976 = vpack.c.bf16 %v955, %v954
          %v977 = vpack.c.bf16 %v957, %v956
          %v978 = vpack.c.bf16 %v959, %v958
          %v979 = vpack.c.bf16 %v961, %v960
          %v980 = vpack.c.bf16 %v963, %v962
          %v981 = vpack.c.bf16 %v965, %v964
          %v998 = vunpack.c.l.b16 %v966
          %v999 = vunpack.c.h.b16 %v966
          %v1000 = vunpack.c.l.b16 %v967
          %v1001 = vunpack.c.h.b16 %v967
          %v1002 = vunpack.c.l.b16 %v968
          %v1003 = vunpack.c.h.b16 %v968
          %v1004 = vunpack.c.l.b16 %v969
          %v1005 = vunpack.c.h.b16 %v969
          %v1006 = vunpack.c.l.b16 %v970
          %v1007 = vunpack.c.h.b16 %v970
          %v1008 = vunpack.c.l.b16 %v971
          %v1009 = vunpack.c.h.b16 %v971
          %v1010 = vunpack.c.l.b16 %v972
          %v1011 = vunpack.c.h.b16 %v972
          %v1012 = vunpack.c.l.b16 %v973
          %v1013 = vunpack.c.h.b16 %v973
          %v1014 = vunpack.c.l.b16 %v974
          %v1015 = vunpack.c.h.b16 %v974
          %v1016 = vunpack.c.l.b16 %v975
          %v1017 = vunpack.c.h.b16 %v975
          %v1018 = vunpack.c.l.b16 %v976
          %v1019 = vunpack.c.h.b16 %v976
          %v1020 = vunpack.c.l.b16 %v977
          %v1021 = vunpack.c.h.b16 %v977
          %v1022 = vunpack.c.l.b16 %v978
          %v1023 = vunpack.c.h.b16 %v978
          %v1024 = vunpack.c.l.b16 %v979
          %v1025 = vunpack.c.h.b16 %v979
          %v1026 = vunpack.c.l.b16 %v980
          %v1027 = vunpack.c.h.b16 %v980
          %v1028 = vunpack.c.l.b16 %v981
          %v1029 = vunpack.c.h.b16 %v981
          %v1030 = vpack.c.b16 %v998, %v998
          %v1031 = vpack.c.b16 %v999, %v999
          %v1032 = vpack.c.b16 %v1000, %v1000
          %v1033 = vpack.c.b16 %v1001, %v1001
          %v1034 = vpack.c.b16 %v1002, %v1002
          %v1035 = vpack.c.b16 %v1003, %v1003
          %v1036 = vpack.c.b16 %v1004, %v1004
          %v1037 = vpack.c.b16 %v1005, %v1005
          %v1038 = vpack.c.b16 %v1006, %v1006
          %v1039 = vpack.c.b16 %v1007, %v1007
          %v1040 = vpack.c.b16 %v1008, %v1008
          %v1041 = vpack.c.b16 %v1009, %v1009
          %v1042 = vpack.c.b16 %v1010, %v1010
          %v1043 = vpack.c.b16 %v1011, %v1011
          %v1044 = vpack.c.b16 %v1012, %v1012
          %v1045 = vpack.c.b16 %v1013, %v1013
          %v1046 = vpack.c.b16 %v1014, %v1014
          %v1047 = vpack.c.b16 %v1015, %v1015
          %v1048 = vpack.c.b16 %v1016, %v1016
          %v1049 = vpack.c.b16 %v1017, %v1017
          %v1050 = vpack.c.b16 %v1018, %v1018
          %v1051 = vpack.c.b16 %v1019, %v1019
          %v1052 = vpack.c.b16 %v1020, %v1020
          %v1053 = vpack.c.b16 %v1021, %v1021
          %v1054 = vpack.c.b16 %v1022, %v1022
          %v1055 = vpack.c.b16 %v1023, %v1023
          %v1056 = vpack.c.b16 %v1024, %v1024
          %v1057 = vpack.c.b16 %v1025, %v1025
          %v1058 = vpack.c.b16 %v1026, %v1026
          %v1059 = vpack.c.b16 %v1027, %v1027
          %v1060 = vpack.c.b16 %v1028, %v1028
          %v1061 = vpack.c.b16 %v1029, %v1029
          %1094 = vst [vmem:[%s241] sm:$0xf] %v1030
          %1095 = vst [vmem:[%s241 + $0x4] sm:$0xf] %v1031
          %1096 = vst [vmem:[%s241 + $0x8] sm:$0xf] %v1032
          %1097 = vst [vmem:[%s241 + $0xc] sm:$0xf] %v1033
          %1098 = vst [vmem:[%s241 + $0x10] sm:$0xf] %v1034
          %1099 = vst [vmem:[%s241 + $0x14] sm:$0xf] %v1035
          %1100 = vst [vmem:[%s241 + $0x18] sm:$0xf] %v1036
          %1101 = vst [vmem:[%s241 + $0x1c] sm:$0xf] %v1037
          %1102 = vst [vmem:[%s241 + $0x20] sm:$0xf] %v1038
          %1103 = vst [vmem:[%s241 + $0x24] sm:$0xf] %v1039
          %1104 = vst [vmem:[%s241 + $0x28] sm:$0xf] %v1040
          %1105 = vst [vmem:[%s241 + $0x2c] sm:$0xf] %v1041
          %1106 = vst [vmem:[%s241 + $0x30] sm:$0xf] %v1042
          %1107 = vst [vmem:[%s241 + $0x34] sm:$0xf] %v1043
          %1108 = vst [vmem:[%s241 + $0x38] sm:$0xf] %v1044
          %1109 = vst [vmem:[%s241 + $0x3c] sm:$0xf] %v1045
          %1110 = vst [vmem:[%s241 + $0x40] sm:$0xf] %v1046
          %1111 = vst [vmem:[%s241 + $0x44] sm:$0xf] %v1047
          %1112 = vst [vmem:[%s241 + $0x48] sm:$0xf] %v1048
          %1113 = vst [vmem:[%s241 + $0x4c] sm:$0xf] %v1049
          %1114 = vst [vmem:[%s241 + $0x50] sm:$0xf] %v1050
          %1115 = vst [vmem:[%s241 + $0x54] sm:$0xf] %v1051
          %1116 = vst [vmem:[%s241 + $0x58] sm:$0xf] %v1052
          %1117 = vst [vmem:[%s241 + $0x5c] sm:$0xf] %v1053
          %1118 = vst [vmem:[%s241 + $0x60] sm:$0xf] %v1054
          %1119 = vst [vmem:[%s241 + $0x64] sm:$0xf] %v1055
          %1120 = vst [vmem:[%s241 + $0x68] sm:$0xf] %v1056
          %1121 = vst [vmem:[%s241 + $0x6c] sm:$0xf] %v1057
          %1122 = vst [vmem:[%s241 + $0x70] sm:$0xf] %v1058
          %1123 = vst [vmem:[%s241 + $0x74] sm:$0xf] %v1059
          %1124 = vst [vmem:[%s241 + $0x78] sm:$0xf] %v1060
          %1125 = vst [vmem:[%s241 + $0x7c] sm:$0xf] %v1061
        $region48: #{tpu_custom_call.1} parent=31 // pred_fallthru
          _
        %s1126 = sand.u32 %s127, 1
        %s1127 = scalar_lea.sflag [#allocation5], %s1126
        %s1128 = sand.u32 %s127, 1
        %s1129 = smul.addr %s1128, 128
        %s1130 = scalar_lea.vmem [#allocation8], %s1129
        // Predicated region
        $region49: #{tpu_custom_call.1} parent=31 // pred_check
          %p1131 = pneg %p137
        $region50: #{tpu_custom_call.1} parent=31 // pred_check_branch
          %1133 = sbr.rel (%p1131) target = $region52
        $region51: #{tpu_custom_call.1} parent=31 // pred_region
          %s1134 = smul.u32 32, %s27
          %s1136 = ssub.s32 2048, 2048
          %1137 = vsyncadd %s1127, %s1136
          %s1138 = smul.addr %s26, 32
          %s1139 = sadd.s32 %s1134, %s1138
          %s1140 = smul.addr %s1139, 64
          %s1141 = scalar_lea.hbm %s3, %s1140
          %s1142 = sshll.u32 %s1130, 4
          %s1143 = int_to_ptr.vmem [resolvable:$true] %s1142
          %1148 = dma.vmem_to_hbm [thread:$0]  %s1143, 2048, %s1141, %s1127, 64, 64, 4
        $region52: #{tpu_custom_call.1} parent=31 // pred_fallthru
          _
      $region32: #{tpu_custom_call.1} parent=5 // pred_fallthru
        _
      %p1149 = scmp.le.s32.totalorder 2, %s16
      // Predicated region
      $region53: #{tpu_custom_call.1} parent=5 // pred_check
        %p1150 = pneg %p1149
      $region54: #{tpu_custom_call.1} parent=5 // pred_check_branch
        %1152 = sbr.rel (%p1150) target = $region56
      $region55: #{tpu_custom_call.1} parent=5 // pred_region
        %s1153 = ssub.s32 %s16, 2
        // Predicated region
        $region57: #{tpu_custom_call.1} parent=55 // pred_check
          %p1154 = pneg %p143
        $region58: #{tpu_custom_call.1} parent=55 // pred_check_branch
          %1156 = sbr.rel (%p1154) target = $region60
        $region59: #{tpu_custom_call.1} parent=55 // pred_region
          %s1157 = sand.u32 %s128, 1
          %s1158 = scalar_lea.sflag [#allocation5], %s1157
          %s1159 = sand.u32 %s128, 1
          %s1160 = smul.addr %s1159, 128
          %s1161 = scalar_lea.vmem [#allocation8], %s1160
          %1162 = dma.done %s1158, 2048
        $region60: #{tpu_custom_call.1} parent=55 // pred_fallthru
          _
      $region56: #{tpu_custom_call.1} parent=5 // pred_fallthru
        _
    $region6: #{tpu_custom_call.1} parent=1 // loop_footer
      %s20 = sadd.s32 1, %s16
    $region7: #{tpu_custom_call.1} parent=1 // loop_footer_branch
      %15 = sbr.rel target = $region3
    $region8: #{tpu_custom_call.1} parent=1 // loop_exit
      _
    %1163 = vsyncpa [#allocation4], 1
    %s1164 = scalar_lea.sflag [#allocation4], 1
    %1165 = vsyncpa %s1164, 1
    %1166 = vsyncpa [#allocation7], 1
    %1167 = vsyncpa [#allocation5], 1
    %s1168 = scalar_lea.sflag [#allocation5], 1
    %1169 = vsyncpa %s1168, 1

</llo_original>
